<compile_context>
chip_gen: v7x
topology: tpu7x:2x2x1
jax: 0.10.0
libtpu: 0.0.40
codegen_flags: <defaults>
</compile_context>

<pallas_src>
import jax
import jax.numpy as jnp
from jax.experimental import pallas as pl
from jax.experimental.pallas import tpu as pltpu


def _sym_pad_kernel(x_ref, o_ref):
    g = pl.program_id(0)

    nb, ct, hp1, wp1 = o_ref.shape
    h, w = hp1 - 1, wp1 - 1

    # Tiny zero tiles for the 1-pixel border (one row, one column).
    zrow = jnp.zeros((nb, ct, 1, wp1), dtype=o_ref.dtype)
    zcol = jnp.zeros((nb, ct, hp1, 1), dtype=o_ref.dtype)

    # Group 0: ZeroPad2d((1, 0, 1, 0)) -> zero row 0 and col 0, data at [1:, 1:].
    @pl.when(g == 0)
    def _():
        o_ref[:, :, pl.ds(0, 1), :] = zrow
        o_ref[:, :, :, pl.ds(0, 1)] = zcol
        o_ref[:, :, pl.ds(1, h), pl.ds(1, w)] = x_ref[...]

    # Group 1: ZeroPad2d((1, 0, 0, 1)) -> zero row h and col 0, data at [:h, 1:].
    @pl.when(g == 1)
    def _():
        o_ref[:, :, pl.ds(h, 1), :] = zrow
        o_ref[:, :, :, pl.ds(0, 1)] = zcol
        o_ref[:, :, pl.ds(0, h), pl.ds(1, w)] = x_ref[...]

    # Group 2: ZeroPad2d((0, 1, 1, 0)) -> zero row 0 and col w, data at [1:, :w].
    @pl.when(g == 2)
    def _():
        o_ref[:, :, pl.ds(0, 1), :] = zrow
        o_ref[:, :, :, pl.ds(w, 1)] = zcol
        o_ref[:, :, pl.ds(1, h), pl.ds(0, w)] = x_ref[...]

    # Group 3: ZeroPad2d((0, 1, 0, 1)) -> zero row h and col w, data at [:h, :w].
    @pl.when(g == 3)
    def _():
        o_ref[:, :, pl.ds(h, 1), :] = zrow
        o_ref[:, :, :, pl.ds(w, 1)] = zcol
        o_ref[:, :, pl.ds(0, h), pl.ds(0, w)] = x_ref[...]


# ---------------------------------------------------------------------------
# VMEM-aware block sizing
# ---------------------------------------------------------------------------

def _round_up(v: int, m: int) -> int:
    return -(-v // m) * m


def _padded_plane_bytes(rows: int, cols: int, itemsize: int) -> int:
    """Bytes of one (rows, cols) plane in VMEM's (sublane, 128)-tiled layout."""
    sublane = max(32 // itemsize, 1)  # f32 -> 8, bf16 -> 16, int8/fp8 -> 32
    return _round_up(max(rows, 1), sublane) * _round_up(max(cols, 1), 128) * itemsize


def _block_vmem_bytes(nb: int, ct: int, h: int, w: int, itemsize: int) -> int:
    """Padded VMEM footprint of one grid step: 2x (in + out) + border temps."""
    in_b = nb * ct * _padded_plane_bytes(h, w, itemsize)
    out_b = nb * ct * _padded_plane_bytes(h + 1, w + 1, itemsize)
    zrow_b = nb * ct * _padded_plane_bytes(1, w + 1, itemsize)
    zcol_b = nb * ct * _padded_plane_bytes(h + 1, 1, itemsize)
    return 2 * (in_b + out_b) + zrow_b + zcol_b


def _vmem_limits() -> tuple[int, int]:
    """(vmem_limit_bytes for CompilerParams, block budget for the tile picker)."""
    physical = 64 * 1024 * 1024  # conservative default = v7x per-TC VMEM
    try:
        physical = int(pltpu.get_tpu_info().vmem_capacity_bytes)
    except Exception:
        pass
    # ~100 MiB scoped on 128 MiB chips (v5e/v6e), ~50 MiB on 64 MiB (v7x).
    vmem_limit = int(physical * 0.78)
    # Leave headroom under the scoped limit for Mosaic internals / semaphores.
    block_budget = int(vmem_limit * 0.85)
    return vmem_limit, block_budget


def _pick_block(n: int, sub_c: int, h: int, w: int, itemsize: int,
                budget_bytes: int) -> tuple[int, int]:
    """Largest (nb, ct) with nb | N, ct | C/4 whose padded, double-buffered
    footprint fits the VMEM budget.  Ties prefer larger ct (more contiguous
    channels per DMA)."""
    best = None
    for ct in range(sub_c, 0, -1):
        if sub_c % ct:
            continue
        for nb in range(n, 0, -1):
            if n % nb:
                continue
            if _block_vmem_bytes(nb, ct, h, w, itemsize) <= budget_bytes:
                cand = (nb * ct, ct, nb)
                if best is None or cand > best:
                    best = cand
    if best is None:
        raise ValueError(
            "SymmetricOnePad2d: a single (1, 1, H+1, W+1) block of "
            f"H={h}, W={w} exceeds the VMEM budget ({budget_bytes} bytes); "
            "an H/W-tiled variant is required for this size."
        )
    _, ct, nb = best
    return nb, ct


# ---------------------------------------------------------------------------
# Public wrapper
# ---------------------------------------------------------------------------

def symmetric_one_pad_2d(x: jax.Array) -> jax.Array:
    """Pallas equivalent of SymmetricOnePad2d.forward. x: (N, C, H, W), C % 4 == 0."""
    N, C, H, W = x.shape
    if C % 4 != 0:
        raise ValueError("channel count must be divisible by 4")
    sub = C // 4
    itemsize = jnp.dtype(x.dtype).itemsize

    vmem_limit, block_budget = _vmem_limits()
    nb, ct = _pick_block(N, sub, H, W, itemsize, block_budget)
    n_tiles = N // nb     # grid extent along the batch axis
    cpg = sub // ct       # channel tiles per group

    in_bytes = N * C * H * W * itemsize
    out_bytes = N * C * (H + 1) * (W + 1) * itemsize

    return pl.pallas_call(
        _sym_pad_kernel,
        out_shape=jax.ShapeDtypeStruct((N, C, H + 1, W + 1), x.dtype),
        grid_spec=pltpu.PrefetchScalarGridSpec(
            num_scalar_prefetch=0,
            # Leading extent-4 group axis: balanced 2/2 split across v7x's two
            # TensorCores; all axes produce independent output blocks.
            grid=(4, n_tiles, cpg),
            in_specs=[
                pl.BlockSpec((nb, ct, H, W),
                             lambda g, n, c: (n, g * cpg + c, 0, 0)),
            ],
            out_specs=pl.BlockSpec((nb, ct, H + 1, W + 1),
                                   lambda g, n, c: (n, g * cpg + c, 0, 0)),
        ),
        compiler_params=pltpu.CompilerParams(
            dimension_semantics=("parallel", "parallel", "parallel"),
            vmem_limit_bytes=vmem_limit,
        ),
        cost_estimate=pl.CostEstimate(
            flops=0, transcendentals=0, bytes_accessed=in_bytes + out_bytes),
    )(x)


def _reference(x: jax.Array) -> jax.Array:
    """Plain-JAX reference mirroring the PyTorch module semantics."""
    sub = x.shape[1] // 4
    x1, x2, x3, x4 = (
        x[:, :sub],
        x[:, sub:2 * sub],
        x[:, 2 * sub:3 * sub],
        x[:, 3 * sub:],
    )
    p = lambda a, top, bot, left, right: jnp.pad(
        a, ((0, 0), (0, 0), (top, bot), (left, right))
    )
    x1 = p(x1, 1, 0, 1, 0)  # ZeroPad2d((1,0,1,0))
    x2 = p(x2, 0, 1, 1, 0)  # ZeroPad2d((1,0,0,1))
    x3 = p(x3, 1, 0, 0, 1)  # ZeroPad2d((0,1,1,0))
    x4 = p(x4, 0, 1, 0, 1)  # ZeroPad2d((0,1,0,1))
    return jnp.concatenate((x1, x2, x3, x4), axis=1)


if __name__ == "__main__":
    key = jax.random.PRNGKey(0)
    N, C, H, W = 2, 8, 16, 16  # C divisible by 4 -> sub = 2
    x = jax.random.normal(key, (N, C, H, W), dtype=jnp.float32)

    out = symmetric_one_pad_2d(x)
    out = jax.block_until_ready(out)

    ref = _reference(x)
    assert out.shape == (N, C, H + 1, W + 1), out.shape
    assert jnp.allclose(out, ref), "Pallas output mismatch vs reference"

    print("KERNEL_OK")
</pallas_src>

<mosaic_0001>
module attributes {stable_mosaic.version = 11 : i64} {
  func.func @_sym_pad_kernel(%arg0: i32, %arg1: i32, %arg2: i32, %arg3: memref<2x2x16x16xf32, #tpu.memory_space<vmem>>, %arg4: memref<2x2x17x17xf32, #tpu.memory_space<vmem>>) attributes {dimension_semantics = [#tpu.dimension_semantics<parallel>, #tpu.dimension_semantics<parallel>, #tpu.dimension_semantics<parallel>], iteration_bounds = array<i64: 4, 1, 1>, scalar_prefetch = 0 : i64, scratch_operands = 0 : i64, tpu.core_type = #tpu.core_type<tc>, window_params = [{transform_indices = @transform_0, window_bounds = array<i64: 2, 2, 16, 16>}, {transform_indices = @transform_1, window_bounds = array<i64: 2, 2, 17, 17>}]} {
    %cst = arith.constant 0.000000e+00 : f32
    %0 = vector.broadcast %cst : f32 to vector<2x2x1x17xf32>
    %cst_0 = arith.constant 0.000000e+00 : f32
    %1 = vector.broadcast %cst_0 : f32 to vector<2x2x17x1xf32>
    %c0_i32 = arith.constant 0 : i32
    %2 = arith.cmpi eq, %arg0, %c0_i32 : i32
    %3 = arith.extui %2 : i1 to i32
    %c0_i32_1 = arith.constant 0 : i32
    %4 = arith.cmpi ne, %3, %c0_i32_1 : i32
    scf.if %4 {
      %c0 = arith.constant 0 : index
      %c0_5 = arith.constant 0 : index
      %c0_6 = arith.constant 0 : index
      %c0_7 = arith.constant 0 : index
      %14 = vector.load %arg4[%c0, %c0_5, %c0_6, %c0_7] : memref<2x2x17x17xf32, #tpu.memory_space<vmem>>, vector<2x2x1x17xf32>
      tpu.vector_store %arg4[%c0, %c0_5, %c0_6, %c0_7], %0 {strides = array<i32>} : memref<2x2x17x17xf32, #tpu.memory_space<vmem>>, vector<2x2x1x17xf32>,
      %c0_8 = arith.constant 0 : index
      %c0_9 = arith.constant 0 : index
      %c0_10 = arith.constant 0 : index
      %c0_11 = arith.constant 0 : index
      %15 = vector.load %arg4[%c0_8, %c0_9, %c0_10, %c0_11] : memref<2x2x17x17xf32, #tpu.memory_space<vmem>>, vector<2x2x17x1xf32>
      tpu.vector_store %arg4[%c0_8, %c0_9, %c0_10, %c0_11], %1 {strides = array<i32>} : memref<2x2x17x17xf32, #tpu.memory_space<vmem>>, vector<2x2x17x1xf32>,
      %c0_12 = arith.constant 0 : index
      %c0_13 = arith.constant 0 : index
      %c0_14 = arith.constant 0 : index
      %c0_15 = arith.constant 0 : index
      %16 = vector.load %arg3[%c0_12, %c0_13, %c0_14, %c0_15] : memref<2x2x16x16xf32, #tpu.memory_space<vmem>>, vector<2x2x16x16xf32>
      %c0_16 = arith.constant 0 : index
      %c0_17 = arith.constant 0 : index
      %c1 = arith.constant 1 : index
      %c1_18 = arith.constant 1 : index
      %17 = vector.load %arg4[%c0_16, %c0_17, %c1, %c1_18] : memref<2x2x17x17xf32, #tpu.memory_space<vmem>>, vector<2x2x16x16xf32>
      tpu.vector_store %arg4[%c0_16, %c0_17, %c1, %c1_18], %16 {strides = array<i32>} : memref<2x2x17x17xf32, #tpu.memory_space<vmem>>, vector<2x2x16x16xf32>,
    } else {
    }
    %c1_i32 = arith.constant 1 : i32
    %5 = arith.cmpi eq, %arg0, %c1_i32 : i32
    %6 = arith.extui %5 : i1 to i32
    %c0_i32_2 = arith.constant 0 : i32
    %7 = arith.cmpi ne, %6, %c0_i32_2 : i32
    scf.if %7 {
      %c0 = arith.constant 0 : index
      %c0_5 = arith.constant 0 : index
      %c16 = arith.constant 16 : index
      %c0_6 = arith.constant 0 : index
      %14 = vector.load %arg4[%c0, %c0_5, %c16, %c0_6] : memref<2x2x17x17xf32, #tpu.memory_space<vmem>>, vector<2x2x1x17xf32>
      tpu.vector_store %arg4[%c0, %c0_5, %c16, %c0_6], %0 {strides = array<i32>} : memref<2x2x17x17xf32, #tpu.memory_space<vmem>>, vector<2x2x1x17xf32>,
      %c0_7 = arith.constant 0 : index
      %c0_8 = arith.constant 0 : index
      %c0_9 = arith.constant 0 : index
      %c0_10 = arith.constant 0 : index
      %15 = vector.load %arg4[%c0_7, %c0_8, %c0_9, %c0_10] : memref<2x2x17x17xf32, #tpu.memory_space<vmem>>, vector<2x2x17x1xf32>
      tpu.vector_store %arg4[%c0_7, %c0_8, %c0_9, %c0_10], %1 {strides = array<i32>} : memref<2x2x17x17xf32, #tpu.memory_space<vmem>>, vector<2x2x17x1xf32>,
      %c0_11 = arith.constant 0 : index
      %c0_12 = arith.constant 0 : index
      %c0_13 = arith.constant 0 : index
      %c0_14 = arith.constant 0 : index
      %16 = vector.load %arg3[%c0_11, %c0_12, %c0_13, %c0_14] : memref<2x2x16x16xf32, #tpu.memory_space<vmem>>, vector<2x2x16x16xf32>
      %c0_15 = arith.constant 0 : index
      %c0_16 = arith.constant 0 : index
      %c0_17 = arith.constant 0 : index
      %c1 = arith.constant 1 : index
      %17 = vector.load %arg4[%c0_15, %c0_16, %c0_17, %c1] : memref<2x2x17x17xf32, #tpu.memory_space<vmem>>, vector<2x2x16x16xf32>
      tpu.vector_store %arg4[%c0_15, %c0_16, %c0_17, %c1], %16 {strides = array<i32>} : memref<2x2x17x17xf32, #tpu.memory_space<vmem>>, vector<2x2x16x16xf32>,
    } else {
    }
    %c2_i32 = arith.constant 2 : i32
    %8 = arith.cmpi eq, %arg0, %c2_i32 : i32
    %9 = arith.extui %8 : i1 to i32
    %c0_i32_3 = arith.constant 0 : i32
    %10 = arith.cmpi ne, %9, %c0_i32_3 : i32
    scf.if %10 {
      %c0 = arith.constant 0 : index
      %c0_5 = arith.constant 0 : index
      %c0_6 = arith.constant 0 : index
      %c0_7 = arith.constant 0 : index
      %14 = vector.load %arg4[%c0, %c0_5, %c0_6, %c0_7] : memref<2x2x17x17xf32, #tpu.memory_space<vmem>>, vector<2x2x1x17xf32>
      tpu.vector_store %arg4[%c0, %c0_5, %c0_6, %c0_7], %0 {strides = array<i32>} : memref<2x2x17x17xf32, #tpu.memory_space<vmem>>, vector<2x2x1x17xf32>,
      %c0_8 = arith.constant 0 : index
      %c0_9 = arith.constant 0 : index
      %c0_10 = arith.constant 0 : index
      %c16 = arith.constant 16 : index
      %15 = vector.load %arg4[%c0_8, %c0_9, %c0_10, %c16] : memref<2x2x17x17xf32, #tpu.memory_space<vmem>>, vector<2x2x17x1xf32>
      tpu.vector_store %arg4[%c0_8, %c0_9, %c0_10, %c16], %1 {strides = array<i32>} : memref<2x2x17x17xf32, #tpu.memory_space<vmem>>, vector<2x2x17x1xf32>,
      %c0_11 = arith.constant 0 : index
      %c0_12 = arith.constant 0 : index
      %c0_13 = arith.constant 0 : index
      %c0_14 = arith.constant 0 : index
      %16 = vector.load %arg3[%c0_11, %c0_12, %c0_13, %c0_14] : memref<2x2x16x16xf32, #tpu.memory_space<vmem>>, vector<2x2x16x16xf32>
      %c0_15 = arith.constant 0 : index
      %c0_16 = arith.constant 0 : index
      %c1 = arith.constant 1 : index
      %c0_17 = arith.constant 0 : index
      %17 = vector.load %arg4[%c0_15, %c0_16, %c1, %c0_17] : memref<2x2x17x17xf32, #tpu.memory_space<vmem>>, vector<2x2x16x16xf32>
      tpu.vector_store %arg4[%c0_15, %c0_16, %c1, %c0_17], %16 {strides = array<i32>} : memref<2x2x17x17xf32, #tpu.memory_space<vmem>>, vector<2x2x16x16xf32>,
    } else {
    }
    %c3_i32 = arith.constant 3 : i32
    %11 = arith.cmpi eq, %arg0, %c3_i32 : i32
    %12 = arith.extui %11 : i1 to i32
    %c0_i32_4 = arith.constant 0 : i32
    %13 = arith.cmpi ne, %12, %c0_i32_4 : i32
    scf.if %13 {
      %c0 = arith.constant 0 : index
      %c0_5 = arith.constant 0 : index
      %c16 = arith.constant 16 : index
      %c0_6 = arith.constant 0 : index
      %14 = vector.load %arg4[%c0, %c0_5, %c16, %c0_6] : memref<2x2x17x17xf32, #tpu.memory_space<vmem>>, vector<2x2x1x17xf32>
      tpu.vector_store %arg4[%c0, %c0_5, %c16, %c0_6], %0 {strides = array<i32>} : memref<2x2x17x17xf32, #tpu.memory_space<vmem>>, vector<2x2x1x17xf32>,
      %c0_7 = arith.constant 0 : index
      %c0_8 = arith.constant 0 : index
      %c0_9 = arith.constant 0 : index
      %c16_10 = arith.constant 16 : index
      %15 = vector.load %arg4[%c0_7, %c0_8, %c0_9, %c16_10] : memref<2x2x17x17xf32, #tpu.memory_space<vmem>>, vector<2x2x17x1xf32>
      tpu.vector_store %arg4[%c0_7, %c0_8, %c0_9, %c16_10], %1 {strides = array<i32>} : memref<2x2x17x17xf32, #tpu.memory_space<vmem>>, vector<2x2x17x1xf32>,
      %c0_11 = arith.constant 0 : index
      %c0_12 = arith.constant 0 : index
      %c0_13 = arith.constant 0 : index
      %c0_14 = arith.constant 0 : index
      %16 = vector.load %arg3[%c0_11, %c0_12, %c0_13, %c0_14] : memref<2x2x16x16xf32, #tpu.memory_space<vmem>>, vector<2x2x16x16xf32>
      %c0_15 = arith.constant 0 : index
      %c0_16 = arith.constant 0 : index
      %c0_17 = arith.constant 0 : index
      %c0_18 = arith.constant 0 : index
      %17 = vector.load %arg4[%c0_15, %c0_16, %c0_17, %c0_18] : memref<2x2x17x17xf32, #tpu.memory_space<vmem>>, vector<2x2x16x16xf32>
      tpu.vector_store %arg4[%c0_15, %c0_16, %c0_17, %c0_18], %16 {strides = array<i32>} : memref<2x2x17x17xf32, #tpu.memory_space<vmem>>, vector<2x2x16x16xf32>,
    } else {
    }
    return
  }
  func.func @transform_0(%arg0: i32, %arg1: i32, %arg2: i32) -> (i32, i32, i32, i32) {
    %c1_i32 = arith.constant 1 : i32
    %0 = arith.muli %arg0, %c1_i32 : i32
    %1 = arith.addi %0, %arg2 : i32
    %c0_i32 = arith.constant 0 : i32
    %c0_i32_0 = arith.constant 0 : i32
    %c0_i32_1 = arith.constant 0 : i32
    return %arg1, %1, %c0_i32, %c0_i32_0 : i32, i32, i32, i32
  }
  func.func @transform_1(%arg0: i32, %arg1: i32, %arg2: i32) -> (i32, i32, i32, i32) {
    %c1_i32 = arith.constant 1 : i32
    %0 = arith.muli %arg0, %c1_i32 : i32
    %1 = arith.addi %0, %arg2 : i32
    %c0_i32 = arith.constant 0 : i32
    %c0_i32_0 = arith.constant 0 : i32
    %c0_i32_1 = arith.constant 0 : i32
    return %arg1, %1, %c0_i32, %c0_i32_0 : i32, i32, i32, i32
  }
}

</mosaic_0001>

<llo_original>
// kernel: tpu_custom_call.1
$region0: #{tpu_custom_call.1}
  #allocation0 [shape = 'u32[]', space=smem, size = 0x4, offset = 0x4, fixed_abs, tag = 'smem constant byte address 0x4 - core index']
  #allocation1 [shape = 'u32[144,128]{1,0:T(1,128)}', space=vmem, size = 0x12000, scoped, tag = 'internal scratch']
  #allocation5 [shape = 's32[]', space=sflag, size = 0x4, offset = 0, fixed_abs, tag = 'sflag constant byte address 0x0 - dummy sync flag']
  %s0 = inlined_call_operand.hbm [shape: f32[2,8,16,16], index: 0, kind: input, shape index: {}]
  %s1 = inlined_call_operand.vmem [shape: f32[2,8,17,17], index: 1, kind: output, shape index: {}]
  %s2 = sld [smem:[#allocation0]]
  $region91: #{tpu_custom_call.1} parent=0
    _
  %s4 = ssub.s32 1, %s2
  %s5 = scalar_select 0, %s4, %s2
  $region1: #{tpu_custom_call.1} parent=0
    #allocation2 [shape = 'u8[65536]{0}', space=vmem, size = 0x10000, scoped, tag = 'input window, operand 0']
    #allocation3 [shape = 's32[2]{0}', space=sflag, size = 0x8, scoped, tag = 'scoped memory for tpu_custom_call.1']
    #allocation4 [shape = 'u8[98304]{0}', space=vmem, size = 0x18000, scoped, tag = 'output window, operand 0']
    %6 = vsyncpa [#allocation3], 0
    %s7 = scalar_lea.sflag [#allocation3], 1
    %8 = vsyncpa %s7, 0
    loop: start=0, step=1, limit=6
    $region2: #{tpu_custom_call.1} parent=1 // loop_pre_header
      _
    $region3: #{tpu_custom_call.1} parent=1 // loop_header
      %s10 = sphi 0, %s14
      %p11 = scmp.ge.s32.totalorder %s10, 6
      %s17 = sphi 0, %s36
      %s18 = sphi 0, %s32
      %s19 = sphi 0, %s28
      %s20 = sphi 0, %s17
      %s21 = sphi 0, %s18
      %s22 = sphi 0, %s19
      %s23 = sphi 0, %s20
      %s24 = sphi 0, %s21
      %s25 = sphi 0, %s22
      %s43 = sphi 0, %s45
      %s46 = sphi 0, %s43
      %s47 = sphi 0, %s46
      %s63 = sphi 0, %s47
      %s73 = sphi 0, %s75
      %s76 = sphi 0, %s73
      %s77 = sphi 0, %s76
      %s93 = sphi 0, %s77
    $region4: #{tpu_custom_call.1} parent=1 // loop_header_branch
      %13 = sbr.rel (%p11) target = $region8
    $region5: #{tpu_custom_call.1} parent=1 // loop_body
      %s15 = ssub.s32 %s10, 1
      %s16 = ssub.s32 %s10, 2
      %s26 = sadd.s32 1, %s19
      %p27 = scmp.ge.s32.totalorder %s26, 1
      %s28 = scalar_select %p27, 0, %s26
      %s29 = sadd.s32 1, %s18
      %s30 = scalar_select %p27, %s29, %s18
      %p31 = scmp.ge.s32.totalorder %s30, 1
      %s32 = scalar_select %p31, 0, %s30
      %s33 = sadd.s32 1, %s17
      %s34 = scalar_select %p31, %s33, %s17
      %p35 = scmp.ge.s32.totalorder %s34, 4
      %s36 = scalar_select %p35, 0, %s34
      %s37 = sadd.s32 %s17, %s19
      %s38 = sadd.s32 %s36, %s28
      %s39 = ssub.s32 %s18, %s32
      %s40 = ssub.s32 %s37, %s38
      %s41 = sor.u32 %s39, %s40
      %p42 = scmp.eq.s32.totalorder %s41, 0
      %s44 = sadd.s32 %s43, 1
      %s45 = scalar_select %p42, %s43, %s44
      %p48 = pneg %p42
      %p49 = scmp.eq.s32.totalorder %s10, 3
      %p50 = por %p48, %p49
      %p51 = scmp.ne.s32.totalorder %s43, %s46
      %p52 = scmp.eq.s32.totalorder %s10, 0
      %p53 = por %p51, %p52
      %p54 = scmp.ne.s32.totalorder %s43, %s46
      %p55 = scmp.eq.s32.totalorder %s15, 3
      %p56 = por %p54, %p55
      %p57 = scmp.ne.s32.totalorder %s46, %s47
      %p58 = scmp.eq.s32.totalorder %s15, 0
      %p59 = por %p57, %p58
      %p60 = scmp.ne.s32.totalorder %s46, %s47
      %p61 = scmp.eq.s32.totalorder %s16, 3
      %p62 = por %p60, %p61
      %p64 = scmp.ne.s32.totalorder %s47, %s63
      %p65 = scmp.eq.s32.totalorder %s16, 0
      %p66 = por %p64, %p65
      %s67 = sadd.s32 %s17, %s19
      %s68 = sadd.s32 %s36, %s28
      %s69 = ssub.s32 %s18, %s32
      %s70 = ssub.s32 %s67, %s68
      %s71 = sor.u32 %s69, %s70
      %p72 = scmp.eq.s32.totalorder %s71, 0
      %s74 = sadd.s32 %s73, 1
      %s75 = scalar_select %p72, %s73, %s74
      %p78 = pneg %p72
      %p79 = scmp.eq.s32.totalorder %s10, 3
      %p80 = por %p78, %p79
      %p81 = scmp.ne.s32.totalorder %s73, %s76
      %p82 = scmp.eq.s32.totalorder %s10, 0
      %p83 = por %p81, %p82
      %p84 = scmp.ne.s32.totalorder %s73, %s76
      %p85 = scmp.eq.s32.totalorder %s15, 3
      %p86 = por %p84, %p85
      %p87 = scmp.ne.s32.totalorder %s76, %s77
      %p88 = scmp.eq.s32.totalorder %s15, 0
      %p89 = por %p87, %p88
      %p90 = scmp.ne.s32.totalorder %s76, %s77
      %p91 = scmp.eq.s32.totalorder %s16, 3
      %p92 = por %p90, %p91
      %p94 = scmp.ne.s32.totalorder %s77, %s93
      %p95 = scmp.eq.s32.totalorder %s16, 0
      %p96 = por %p94, %p95
      %p97 = scmp.le.s32.totalorder 1, %s10
      %p98 = scmp.lt.s32.totalorder %s10, 5
      %p99 = pnand %p97, %p98
      %p100 = pneg %p99
      // Predicated region
      $region9: #{tpu_custom_call.1} parent=5 // pred_check
        _
      $region10: #{tpu_custom_call.1} parent=5 // pred_check_branch
        %102 = sbr.rel (%p99) target = $region12
      $region11: #{tpu_custom_call.1} parent=5 // pred_region
        %s103 = ssub.s32 %s10, 1
      $region12: #{tpu_custom_call.1} parent=5 // pred_fallthru
        _
      %p104 = scmp.lt.s32.totalorder %s10, 4
      // Predicated region
      $region13: #{tpu_custom_call.1} parent=5 // pred_check
        %p105 = pneg %p104
      $region14: #{tpu_custom_call.1} parent=5 // pred_check_branch
        %107 = sbr.rel (%p105) target = $region16
      $region15: #{tpu_custom_call.1} parent=5 // pred_region
        // Predicated region
        $region17: #{tpu_custom_call.1} parent=15 // pred_check
          %p108 = pneg %p53
        $region18: #{tpu_custom_call.1} parent=15 // pred_check_branch
          %110 = sbr.rel (%p108) target = $region20
        $region19: #{tpu_custom_call.1} parent=15 // pred_region
          #allocation6 [shape = 'u32[6]{0}', space=smem, size = 0x18, scoped, tag = 'DMA stride descriptor']
          %s111 = sand.u32 %s43, 1
          %s112 = scalar_lea.sflag [#allocation3], %s111
          %s113 = sand.u32 %s43, 1
          %s114 = smul.addr %s113, 64
          %s115 = scalar_lea.vmem [#allocation2], %s114
          %s116 = sadd.s32 %s17, %s19
          %s117 = smul.u32 2, %s18
          %s118 = smul.u32 2, %s116
          %s120 = ssub.s32 1024, 1024
          %121 = vsyncadd %s112, %s120
          %s122 = smul.addr %s118, 2
          %s123 = smul.addr %s117, 16
          %s124 = sadd.s32 %s122, %s123
          %s125 = smul.addr %s124, 128
          %s126 = scalar_lea.hbm %s0, %s125
          %s128 = sshll.u32 1, 14
          %s129 = sxor.u32 4294967295, %s128
          %s131 = sld [smem:[#allocation0]]
          %s132 = sadd.s32 2, %s131
          %s134 = sshll.u32 7, 26
          %s135 = sxor.u32 4294967295, %s134
          %s136 = sand.u32 0, %s135
          %s137 = sshll.u32 %s132, 26
          %s138 = sor.u32 %s136, %s137
          %s139 = sshll.u32 %s115, 4
          %s140 = int_to_ptr.vmem [resolvable:$true] %s139
          %146 = sst [smem:[#allocation6]] 2048
          %s147 = scalar_lea.smem [#allocation6], 1
          %148 = sst [smem:[%s147]] 512
          %s149 = scalar_lea.smem [#allocation6], 2
          %150 = sst [smem:[%s149]] 4
          %s151 = scalar_lea.smem [#allocation6], 3
          %152 = sst [smem:[%s151]] 128
          %s153 = scalar_lea.smem [#allocation6], 4
          %154 = sst [smem:[%s153]] 128
          %s155 = scalar_lea.smem [#allocation6], 5
          %156 = sst [smem:[%s155]] 8
          %158 = dma.general %s126, 1024, %s140, %s112, [#allocation5], [#allocation6], %s138, 0
        $region20: #{tpu_custom_call.1} parent=15 // pred_fallthru
          _
      $region16: #{tpu_custom_call.1} parent=5 // pred_fallthru
        _
      %p159 = scmp.le.s32.totalorder 1, %s10
      %p160 = scmp.lt.s32.totalorder %s10, 5
      %p161 = pnand %p159, %p160
      %p162 = pneg %p161
      // Predicated region
      $region21: #{tpu_custom_call.1} parent=5 // pred_check
        _
      $region22: #{tpu_custom_call.1} parent=5 // pred_check_branch
        %164 = sbr.rel (%p161) target = $region24
      $region23: #{tpu_custom_call.1} parent=5 // pred_region
        %s165 = ssub.s32 %s10, 1
        %s166 = sand.u32 %s46, 1
        %s167 = scalar_lea.sflag [#allocation3], %s166
        %s168 = sand.u32 %s46, 1
        %s169 = smul.addr %s168, 64
        %s170 = scalar_lea.vmem [#allocation2], %s169
        // Predicated region
        $region25: #{tpu_custom_call.1} parent=23 // pred_check
          %p171 = pneg %p59
        $region26: #{tpu_custom_call.1} parent=23 // pred_check_branch
          %173 = sbr.rel (%p171) target = $region28
        $region27: #{tpu_custom_call.1} parent=23 // pred_region
          %174 = dma.done %s167, 1024
        $region28: #{tpu_custom_call.1} parent=23 // pred_fallthru
          _
        %s175 = sand.u32 %s46, 1
        %s176 = scalar_lea.sflag [#allocation3], %s175
        %s177 = sand.u32 %s46, 1
        %s178 = smul.addr %s177, 64
        %s179 = scalar_lea.vmem [#allocation2], %s178
        %p180 = pneg %p59
        %p181 = pneg %p56
        %p182 = pneg %p89
        %p183 = pneg %p86
        %s184 = sand.u32 %s76, 1
        %s185 = sand.u32 %s76, 1
        %s186 = smul.addr %s185, 96
        %s187 = scalar_lea.vmem [#allocation4], %s186
        %s188 = sadd.s32 %s20, %s22
        %s189 = smul.u32 2, %s21
        %s190 = smul.u32 2, %s188
        %s191 = sadd.s32 %s20, %s22
        %s192 = smul.u32 2, %s21
        %s193 = smul.u32 2, %s191
        %p194 = scmp.eq.s32.totalorder %s20, 0
        // Predicated region
        $region29: #{tpu_custom_call.1} parent=23 // pred_check
          %p195 = pneg %p194
        $region30: #{tpu_custom_call.1} parent=23 // pred_check_branch
          %197 = sbr.rel (%p195) target = $region32
        $region31: #{tpu_custom_call.1} parent=23 // pred_region
          %vm198 = vcmask 131072
          %199 = vst.msk [vmem:[%s187] sm:$0x1] %vm198, 0.0
          %200 = vst.msk [vmem:[%s187 + $0x18] sm:$0x1] %vm198, 0.0
          %201 = vst.msk [vmem:[%s187 + $0x30] sm:$0x1] %vm198, 0.0
          %202 = vst.msk [vmem:[%s187 + $0x48] sm:$0x1] %vm198, 0.0
          %vm203 = vcmask 7168
          %204 = vst.msk [vmem:[%s187] sm:$0xff] %vm203, 0.0
          %205 = vst.msk [vmem:[%s187 + $0x8] sm:$0xff] %vm203, 0.0
          %vm206 = vcmask 0
          %207 = vst.msk [vmem:[%s187 + $0x10] sm:$0x1] %vm206, 0.0
          %208 = vst.msk [vmem:[%s187 + $0x18] sm:$0xff] %vm203, 0.0
          %209 = vst.msk [vmem:[%s187 + $0x20] sm:$0xff] %vm203, 0.0
          %210 = vst.msk [vmem:[%s187 + $0x28] sm:$0x1] %vm206, 0.0
          %211 = vst.msk [vmem:[%s187 + $0x30] sm:$0xff] %vm203, 0.0
          %212 = vst.msk [vmem:[%s187 + $0x38] sm:$0xff] %vm203, 0.0
          %213 = vst.msk [vmem:[%s187 + $0x40] sm:$0x1] %vm206, 0.0
          %214 = vst.msk [vmem:[%s187 + $0x48] sm:$0xff] %vm203, 0.0
          %215 = vst.msk [vmem:[%s187 + $0x50] sm:$0xff] %vm203, 0.0
          %216 = vst.msk [vmem:[%s187 + $0x58] sm:$0x1] %vm206, 0.0
          %v217 = vld [vmem:[%s170] sm:$0xff]
          %v218 = vld [vmem:[%s170 + $0x8] sm:$0xff]
          %v219 = vld [vmem:[%s170 + $0x10] sm:$0xff]
          %v220 = vld [vmem:[%s170 + $0x18] sm:$0xff]
          %v221 = vld [vmem:[%s170 + $0x20] sm:$0xff]
          %v222 = vld [vmem:[%s170 + $0x28] sm:$0xff]
          %v223 = vld [vmem:[%s170 + $0x30] sm:$0xff]
          %v224 = vld [vmem:[%s170 + $0x38] sm:$0xff]
          %233 = vrot.lane.b32.xlu0 %v217, 1
          %v234 = vpop.permute.xlu0 %233
          %235 = vrot.lane.b32.xlu0 %v218, 1
          %v236 = vpop.permute.xlu0 %235
          %237 = vrot.lane.b32.xlu0 %v219, 1
          %v238 = vpop.permute.xlu0 %237
          %239 = vrot.lane.b32.xlu0 %v220, 1
          %v240 = vpop.permute.xlu0 %239
          %241 = vrot.lane.b32.xlu0 %v221, 1
          %v242 = vpop.permute.xlu0 %241
          %243 = vrot.lane.b32.xlu0 %v222, 1
          %v244 = vpop.permute.xlu0 %243
          %245 = vrot.lane.b32.xlu0 %v223, 1
          %v246 = vpop.permute.xlu0 %245
          %247 = vrot.lane.b32.xlu0 %v224, 1
          %v248 = vpop.permute.xlu0 %247
          %vm257 = vcmask 138248
          %258 = vst.msk [vmem:[%s187 + $0x1] sm:$0xff] %vm257, %v234
          %259 = vst.msk [vmem:[%s187 + $0x9] sm:$0xff] %vm257, %v236
          %260 = vst.msk [vmem:[%s187 + $0x19] sm:$0xff] %vm257, %v238
          %261 = vst.msk [vmem:[%s187 + $0x21] sm:$0xff] %vm257, %v240
          %262 = vst.msk [vmem:[%s187 + $0x31] sm:$0xff] %vm257, %v242
          %263 = vst.msk [vmem:[%s187 + $0x39] sm:$0xff] %vm257, %v244
          %264 = vst.msk [vmem:[%s187 + $0x49] sm:$0xff] %vm257, %v246
          %265 = vst.msk [vmem:[%s187 + $0x51] sm:$0xff] %vm257, %v248
        $region32: #{tpu_custom_call.1} parent=23 // pred_fallthru
          _
        %p266 = scmp.eq.s32.totalorder %s20, 1
        // Predicated region
        $region33: #{tpu_custom_call.1} parent=23 // pred_check
          %p267 = pneg %p266
        $region34: #{tpu_custom_call.1} parent=23 // pred_check_branch
          %269 = sbr.rel (%p267) target = $region36
        $region35: #{tpu_custom_call.1} parent=23 // pred_region
          %vm270 = vcmask 131072
          %271 = vst.msk [vmem:[%s187 + $0x10] sm:$0x1] %vm270, 0.0
          %272 = vst.msk [vmem:[%s187 + $0x28] sm:$0x1] %vm270, 0.0
          %273 = vst.msk [vmem:[%s187 + $0x40] sm:$0x1] %vm270, 0.0
          %274 = vst.msk [vmem:[%s187 + $0x58] sm:$0x1] %vm270, 0.0
          %vm275 = vcmask 7168
          %276 = vst.msk [vmem:[%s187] sm:$0xff] %vm275, 0.0
          %277 = vst.msk [vmem:[%s187 + $0x8] sm:$0xff] %vm275, 0.0
          %vm278 = vcmask 0
          %279 = vst.msk [vmem:[%s187 + $0x10] sm:$0x1] %vm278, 0.0
          %280 = vst.msk [vmem:[%s187 + $0x18] sm:$0xff] %vm275, 0.0
          %281 = vst.msk [vmem:[%s187 + $0x20] sm:$0xff] %vm275, 0.0
          %282 = vst.msk [vmem:[%s187 + $0x28] sm:$0x1] %vm278, 0.0
          %283 = vst.msk [vmem:[%s187 + $0x30] sm:$0xff] %vm275, 0.0
          %284 = vst.msk [vmem:[%s187 + $0x38] sm:$0xff] %vm275, 0.0
          %285 = vst.msk [vmem:[%s187 + $0x40] sm:$0x1] %vm278, 0.0
          %286 = vst.msk [vmem:[%s187 + $0x48] sm:$0xff] %vm275, 0.0
          %287 = vst.msk [vmem:[%s187 + $0x50] sm:$0xff] %vm275, 0.0
          %288 = vst.msk [vmem:[%s187 + $0x58] sm:$0x1] %vm278, 0.0
          %v289 = vld [vmem:[%s170] sm:$0xff]
          %v290 = vld [vmem:[%s170 + $0x8] sm:$0xff]
          %v291 = vld [vmem:[%s170 + $0x10] sm:$0xff]
          %v292 = vld [vmem:[%s170 + $0x18] sm:$0xff]
          %v293 = vld [vmem:[%s170 + $0x20] sm:$0xff]
          %v294 = vld [vmem:[%s170 + $0x28] sm:$0xff]
          %v295 = vld [vmem:[%s170 + $0x30] sm:$0xff]
          %v296 = vld [vmem:[%s170 + $0x38] sm:$0xff]
          %305 = vrot.lane.b32.xlu0 %v289, 1
          %v306 = vpop.permute.xlu0 %305
          %307 = vrot.lane.b32.xlu0 %v290, 1
          %v308 = vpop.permute.xlu0 %307
          %309 = vrot.lane.b32.xlu0 %v291, 1
          %v310 = vpop.permute.xlu0 %309
          %311 = vrot.lane.b32.xlu0 %v292, 1
          %v312 = vpop.permute.xlu0 %311
          %313 = vrot.lane.b32.xlu0 %v293, 1
          %v314 = vpop.permute.xlu0 %313
          %315 = vrot.lane.b32.xlu0 %v294, 1
          %v316 = vpop.permute.xlu0 %315
          %317 = vrot.lane.b32.xlu0 %v295, 1
          %v318 = vpop.permute.xlu0 %317
          %319 = vrot.lane.b32.xlu0 %v296, 1
          %v320 = vpop.permute.xlu0 %319
          %vm329 = vcmask 138248
          %330 = vst.msk [vmem:[%s187] sm:$0xff] %vm329, %v306
          %331 = vst.msk [vmem:[%s187 + $0x8] sm:$0xff] %vm329, %v308
          %332 = vst.msk [vmem:[%s187 + $0x18] sm:$0xff] %vm329, %v310
          %333 = vst.msk [vmem:[%s187 + $0x20] sm:$0xff] %vm329, %v312
          %334 = vst.msk [vmem:[%s187 + $0x30] sm:$0xff] %vm329, %v314
          %335 = vst.msk [vmem:[%s187 + $0x38] sm:$0xff] %vm329, %v316
          %336 = vst.msk [vmem:[%s187 + $0x48] sm:$0xff] %vm329, %v318
          %337 = vst.msk [vmem:[%s187 + $0x50] sm:$0xff] %vm329, %v320
        $region36: #{tpu_custom_call.1} parent=23 // pred_fallthru
          _
        %p338 = scmp.eq.s32.totalorder %s20, 2
        // Predicated region
        $region37: #{tpu_custom_call.1} parent=23 // pred_check
          %p339 = pneg %p338
        $region38: #{tpu_custom_call.1} parent=23 // pred_check_branch
          %341 = sbr.rel (%p339) target = $region40
        $region39: #{tpu_custom_call.1} parent=23 // pred_region
          %vm342 = vcmask 131072
          %343 = vst.msk [vmem:[%s187] sm:$0x1] %vm342, 0.0
          %344 = vst.msk [vmem:[%s187 + $0x18] sm:$0x1] %vm342, 0.0
          %345 = vst.msk [vmem:[%s187 + $0x30] sm:$0x1] %vm342, 0.0
          %346 = vst.msk [vmem:[%s187 + $0x48] sm:$0x1] %vm342, 0.0
          %vm347 = vcmask 138368
          %348 = vst.msk [vmem:[%s187] sm:$0xff] %vm347, 0.0
          %349 = vst.msk [vmem:[%s187 + $0x8] sm:$0xff] %vm347, 0.0
          %vm350 = vcmask 131200
          %351 = vst.msk [vmem:[%s187 + $0x10] sm:$0x1] %vm350, 0.0
          %352 = vst.msk [vmem:[%s187 + $0x18] sm:$0xff] %vm347, 0.0
          %353 = vst.msk [vmem:[%s187 + $0x20] sm:$0xff] %vm347, 0.0
          %354 = vst.msk [vmem:[%s187 + $0x28] sm:$0x1] %vm350, 0.0
          %355 = vst.msk [vmem:[%s187 + $0x30] sm:$0xff] %vm347, 0.0
          %356 = vst.msk [vmem:[%s187 + $0x38] sm:$0xff] %vm347, 0.0
          %357 = vst.msk [vmem:[%s187 + $0x40] sm:$0x1] %vm350, 0.0
          %358 = vst.msk [vmem:[%s187 + $0x48] sm:$0xff] %vm347, 0.0
          %359 = vst.msk [vmem:[%s187 + $0x50] sm:$0xff] %vm347, 0.0
          %360 = vst.msk [vmem:[%s187 + $0x58] sm:$0x1] %vm350, 0.0
          %v361 = vld [vmem:[%s170] sm:$0xff]
          %v362 = vld [vmem:[%s170 + $0x8] sm:$0xff]
          %v363 = vld [vmem:[%s170 + $0x10] sm:$0xff]
          %v364 = vld [vmem:[%s170 + $0x18] sm:$0xff]
          %v365 = vld [vmem:[%s170 + $0x20] sm:$0xff]
          %v366 = vld [vmem:[%s170 + $0x28] sm:$0xff]
          %v367 = vld [vmem:[%s170 + $0x30] sm:$0xff]
          %v368 = vld [vmem:[%s170 + $0x38] sm:$0xff]
          %vm369 = vcmask 130048
          %370 = vst.msk [vmem:[%s187 + $0x1] sm:$0xff] %vm369, %v361
          %371 = vst.msk [vmem:[%s187 + $0x9] sm:$0xff] %vm369, %v362
          %372 = vst.msk [vmem:[%s187 + $0x19] sm:$0xff] %vm369, %v363
          %373 = vst.msk [vmem:[%s187 + $0x21] sm:$0xff] %vm369, %v364
          %374 = vst.msk [vmem:[%s187 + $0x31] sm:$0xff] %vm369, %v365
          %375 = vst.msk [vmem:[%s187 + $0x39] sm:$0xff] %vm369, %v366
          %376 = vst.msk [vmem:[%s187 + $0x49] sm:$0xff] %vm369, %v367
          %377 = vst.msk [vmem:[%s187 + $0x51] sm:$0xff] %vm369, %v368
        $region40: #{tpu_custom_call.1} parent=23 // pred_fallthru
          _
        %p378 = scmp.eq.s32.totalorder %s20, 3
        // Predicated region
        $region41: #{tpu_custom_call.1} parent=23 // pred_check
          %p379 = pneg %p378
        $region42: #{tpu_custom_call.1} parent=23 // pred_check_branch
          %381 = sbr.rel (%p379) target = $region44
        $region43: #{tpu_custom_call.1} parent=23 // pred_region
          %vm382 = vcmask 131072
          %383 = vst.msk [vmem:[%s187 + $0x10] sm:$0x1] %vm382, 0.0
          %384 = vst.msk [vmem:[%s187 + $0x28] sm:$0x1] %vm382, 0.0
          %385 = vst.msk [vmem:[%s187 + $0x40] sm:$0x1] %vm382, 0.0
          %386 = vst.msk [vmem:[%s187 + $0x58] sm:$0x1] %vm382, 0.0
          %vm387 = vcmask 138368
          %388 = vst.msk [vmem:[%s187] sm:$0xff] %vm387, 0.0
          %389 = vst.msk [vmem:[%s187 + $0x8] sm:$0xff] %vm387, 0.0
          %vm390 = vcmask 131200
          %391 = vst.msk [vmem:[%s187 + $0x10] sm:$0x1] %vm390, 0.0
          %392 = vst.msk [vmem:[%s187 + $0x18] sm:$0xff] %vm387, 0.0
          %393 = vst.msk [vmem:[%s187 + $0x20] sm:$0xff] %vm387, 0.0
          %394 = vst.msk [vmem:[%s187 + $0x28] sm:$0x1] %vm390, 0.0
          %395 = vst.msk [vmem:[%s187 + $0x30] sm:$0xff] %vm387, 0.0
          %396 = vst.msk [vmem:[%s187 + $0x38] sm:$0xff] %vm387, 0.0
          %397 = vst.msk [vmem:[%s187 + $0x40] sm:$0x1] %vm390, 0.0
          %398 = vst.msk [vmem:[%s187 + $0x48] sm:$0xff] %vm387, 0.0
          %399 = vst.msk [vmem:[%s187 + $0x50] sm:$0xff] %vm387, 0.0
          %400 = vst.msk [vmem:[%s187 + $0x58] sm:$0x1] %vm390, 0.0
          %v401 = vld [vmem:[%s170] sm:$0xff]
          %v402 = vld [vmem:[%s170 + $0x8] sm:$0xff]
          %v403 = vld [vmem:[%s170 + $0x10] sm:$0xff]
          %v404 = vld [vmem:[%s170 + $0x18] sm:$0xff]
          %v405 = vld [vmem:[%s170 + $0x20] sm:$0xff]
          %v406 = vld [vmem:[%s170 + $0x28] sm:$0xff]
          %v407 = vld [vmem:[%s170 + $0x30] sm:$0xff]
          %v408 = vld [vmem:[%s170 + $0x38] sm:$0xff]
          %vm409 = vcmask 130048
          %410 = vst.msk [vmem:[%s187] sm:$0xff] %vm409, %v401
          %411 = vst.msk [vmem:[%s187 + $0x8] sm:$0xff] %vm409, %v402
          %412 = vst.msk [vmem:[%s187 + $0x18] sm:$0xff] %vm409, %v403
          %413 = vst.msk [vmem:[%s187 + $0x20] sm:$0xff] %vm409, %v404
          %414 = vst.msk [vmem:[%s187 + $0x30] sm:$0xff] %vm409, %v405
          %415 = vst.msk [vmem:[%s187 + $0x38] sm:$0xff] %vm409, %v406
          %416 = vst.msk [vmem:[%s187 + $0x48] sm:$0xff] %vm409, %v407
          %417 = vst.msk [vmem:[%s187 + $0x50] sm:$0xff] %vm409, %v408
        $region44: #{tpu_custom_call.1} parent=23 // pred_fallthru
          _
        %s418 = sand.u32 %s76, 1
        %s419 = sand.u32 %s76, 1
        %s420 = smul.addr %s419, 96
        %s421 = scalar_lea.vmem [#allocation4], %s420
        // Predicated region
        $region45: #{tpu_custom_call.1} parent=23 // pred_check
          %p422 = pneg %p86
        $region46: #{tpu_custom_call.1} parent=23 // pred_check_branch
          %424 = sbr.rel (%p422) target = $region48
        $region47: #{tpu_custom_call.1} parent=23 // pred_region
          %s425 = sadd.s32 %s20, %s22
          %s426 = smul.u32 2, %s21
          %s427 = smul.u32 2, %s425
          %s428 = smul.addr %s427, 3
          %s429 = smul.addr %s426, 24
          %s430 = sadd.s32 %s428, %s429
          %s431 = smul.addr %s430, 8
          %s432 = scalar_lea.vmem %s1, %s431
          // Predicated region
          $region49: #{tpu_custom_call.1} parent=47 // pred_check
            _
          $region50: #{tpu_custom_call.1} parent=47 // pred_check_branch
            %434 = sbr.rel (0) target = $region52
          $region51: #{tpu_custom_call.1} parent=47 // pred_region
            // Predicated region
            $region53: #{tpu_custom_call.1} parent=51 // pred_check
              _
            $region54: #{tpu_custom_call.1} parent=51 // pred_check_branch
              %436 = sbr.rel (0) target = $region56
            $region55: #{tpu_custom_call.1} parent=51 // pred_region
              // Predicated region
              $region68: #{tpu_custom_call.1} parent=55 // pred_check
                _
              $region69: #{tpu_custom_call.1} parent=55 // pred_check_branch
                %473 = sbr.rel (0) target = $region71
              $region70: #{tpu_custom_call.1} parent=55 // pred_region
                loop: start=0, step=1, limit=1
                $region72: #{tpu_custom_call.1} parent=70 // loop_pre_header
                  _
                $region73: #{tpu_custom_call.1} parent=70 // loop_header
                  %s475 = sphi 0, %s479
                  %p476 = scmp.ge.s32.totalorder %s475, 1
                  %s480 = sphi %s421, %s421
                  %s481 = sphi %s432, %s432
                $region74: #{tpu_custom_call.1} parent=70 // loop_header_branch
                  %478 = sbr.rel (%p476) target = $region78
                $region75: #{tpu_custom_call.1} parent=70 // loop_body
                  %v482 = vld [vmem:[%s480] sm:$0xff]
                  %483 = vst [vmem:[%s481] sm:$0xff] %v482
                  %v484 = vld [vmem:[%s480 + $0x8] sm:$0xff]
                  %485 = vst [vmem:[%s481 + $0x8] sm:$0xff] %v484
                  %v486 = vld [vmem:[%s480 + $0x10] sm:$0xff]
                  %487 = vst [vmem:[%s481 + $0x10] sm:$0xff] %v486
                  %v488 = vld [vmem:[%s480 + $0x18] sm:$0xff]
                  %489 = vst [vmem:[%s481 + $0x18] sm:$0xff] %v488
                  %v490 = vld [vmem:[%s480 + $0x20] sm:$0xff]
                  %491 = vst [vmem:[%s481 + $0x20] sm:$0xff] %v490
                  %v492 = vld [vmem:[%s480 + $0x28] sm:$0xff]
                  %493 = vst [vmem:[%s481 + $0x28] sm:$0xff] %v492
                  %v494 = vld [vmem:[%s480 + $0x30] sm:$0xff]
                  %495 = vst [vmem:[%s481 + $0xc0] sm:$0xff] %v494
                  %v496 = vld [vmem:[%s480 + $0x38] sm:$0xff]
                  %497 = vst [vmem:[%s481 + $0xc8] sm:$0xff] %v496
                  %v498 = vld [vmem:[%s480 + $0x40] sm:$0xff]
                  %499 = vst [vmem:[%s481 + $0xd0] sm:$0xff] %v498
                  %v500 = vld [vmem:[%s480 + $0x48] sm:$0xff]
                  %501 = vst [vmem:[%s481 + $0xd8] sm:$0xff] %v500
                  %v502 = vld [vmem:[%s480 + $0x50] sm:$0xff]
                  %503 = vst [vmem:[%s481 + $0xe0] sm:$0xff] %v502
                  %v504 = vld [vmem:[%s480 + $0x58] sm:$0xff]
                  %505 = vst [vmem:[%s481 + $0xe8] sm:$0xff] %v504
                $region76: #{tpu_custom_call.1} parent=70 // loop_footer
                  %s479 = sadd.s32 1, %s475
                $region77: #{tpu_custom_call.1} parent=70 // loop_footer_branch
                  %474 = sbr.rel target = $region73
                $region78: #{tpu_custom_call.1} parent=70 // loop_exit
                  _
              $region71: #{tpu_custom_call.1} parent=55 // pred_fallthru
                _
              // Predicated region
              $region79: #{tpu_custom_call.1} parent=55 // pred_check
                _
              $region80: #{tpu_custom_call.1} parent=55 // pred_check_branch
                %507 = sbr.rel target = $region82
              $region81: #{tpu_custom_call.1} parent=55 // pred_region
                _
              $region82: #{tpu_custom_call.1} parent=55 // pred_fallthru
                _
            $region56: #{tpu_custom_call.1} parent=51 // pred_fallthru
              _
            // Predicated region
            $region57: #{tpu_custom_call.1} parent=51 // pred_check
              _
            $region58: #{tpu_custom_call.1} parent=51 // pred_check_branch
              %438 = sbr.rel target = $region60
            $region59: #{tpu_custom_call.1} parent=51 // pred_region
              loop: start=0, step=1, limit=1
              $region61: #{tpu_custom_call.1} parent=59 // loop_pre_header
                _
              $region62: #{tpu_custom_call.1} parent=59 // loop_header
                %s441 = sphi 0, %s445
                %p442 = scmp.ge.s32.totalorder %s441, 1
                %s446 = sphi %s421, %s421
                %s447 = sphi %s432, %s432
              $region63: #{tpu_custom_call.1} parent=59 // loop_header_branch
                %444 = sbr.rel (%p442) target = $region67
              $region64: #{tpu_custom_call.1} parent=59 // loop_body
                %v448 = vld [vmem:[%s446] sm:$0xff]
                %449 = vst [vmem:[%s447] sm:$0xff] %v448
                %v450 = vld [vmem:[%s446 + $0x8] sm:$0xff]
                %451 = vst [vmem:[%s447 + $0x8] sm:$0xff] %v450
                %v452 = vld [vmem:[%s446 + $0x10] sm:$0xff]
                %453 = vst [vmem:[%s447 + $0x10] sm:$0xff] %v452
                %v454 = vld [vmem:[%s446 + $0x18] sm:$0xff]
                %455 = vst [vmem:[%s447 + $0x18] sm:$0xff] %v454
                %v456 = vld [vmem:[%s446 + $0x20] sm:$0xff]
                %457 = vst [vmem:[%s447 + $0x20] sm:$0xff] %v456
                %v458 = vld [vmem:[%s446 + $0x28] sm:$0xff]
                %459 = vst [vmem:[%s447 + $0x28] sm:$0xff] %v458
                %v460 = vld [vmem:[%s446 + $0x30] sm:$0xff]
                %461 = vst [vmem:[%s447 + $0xc0] sm:$0xff] %v460
                %v462 = vld [vmem:[%s446 + $0x38] sm:$0xff]
                %463 = vst [vmem:[%s447 + $0xc8] sm:$0xff] %v462
                %v464 = vld [vmem:[%s446 + $0x40] sm:$0xff]
                %465 = vst [vmem:[%s447 + $0xd0] sm:$0xff] %v464
                %v466 = vld [vmem:[%s446 + $0x48] sm:$0xff]
                %467 = vst [vmem:[%s447 + $0xd8] sm:$0xff] %v466
                %v468 = vld [vmem:[%s446 + $0x50] sm:$0xff]
                %469 = vst [vmem:[%s447 + $0xe0] sm:$0xff] %v468
                %v470 = vld [vmem:[%s446 + $0x58] sm:$0xff]
                %471 = vst [vmem:[%s447 + $0xe8] sm:$0xff] %v470
              $region65: #{tpu_custom_call.1} parent=59 // loop_footer
                %s445 = sadd.s32 1, %s441
              $region66: #{tpu_custom_call.1} parent=59 // loop_footer_branch
                %440 = sbr.rel target = $region62
              $region67: #{tpu_custom_call.1} parent=59 // loop_exit
                _
            $region60: #{tpu_custom_call.1} parent=51 // pred_fallthru
              _
          $region52: #{tpu_custom_call.1} parent=47 // pred_fallthru
            _
          %508 = vnop
        $region48: #{tpu_custom_call.1} parent=23 // pred_fallthru
          _
      $region24: #{tpu_custom_call.1} parent=5 // pred_fallthru
        _
      %p509 = scmp.le.s32.totalorder 2, %s10
      // Predicated region
      $region83: #{tpu_custom_call.1} parent=5 // pred_check
        %p510 = pneg %p509
      $region84: #{tpu_custom_call.1} parent=5 // pred_check_branch
        %512 = sbr.rel (%p510) target = $region86
      $region85: #{tpu_custom_call.1} parent=5 // pred_region
        %s513 = ssub.s32 %s10, 2
        // Predicated region
        $region87: #{tpu_custom_call.1} parent=85 // pred_check
          %p514 = pneg %p92
        $region88: #{tpu_custom_call.1} parent=85 // pred_check_branch
          %516 = sbr.rel (%p514) target = $region90
        $region89: #{tpu_custom_call.1} parent=85 // pred_region
          %s517 = sand.u32 %s77, 1
          %s518 = sand.u32 %s77, 1
          %s519 = smul.addr %s518, 96
          %s520 = scalar_lea.vmem [#allocation4], %s519
        $region90: #{tpu_custom_call.1} parent=85 // pred_fallthru
          _
      $region86: #{tpu_custom_call.1} parent=5 // pred_fallthru
        _
    $region6: #{tpu_custom_call.1} parent=1 // loop_footer
      %s14 = sadd.s32 1, %s10
    $region7: #{tpu_custom_call.1} parent=1 // loop_footer_branch
      %9 = sbr.rel target = $region3
    $region8: #{tpu_custom_call.1} parent=1 // loop_exit
      _
    %521 = vsyncpa [#allocation3], 1
    %s522 = scalar_lea.sflag [#allocation3], 1
    %523 = vsyncpa %s522, 1

</llo_original>
